<compile_context>
chip_gen: v7x
topology: tpu7x:2x2x1
jax: 0.10.0
libtpu: 0.0.40
codegen_flags: <defaults>
</compile_context>

<pallas_src>
import functools

import numpy as np
import jax
import jax.numpy as jnp
from jax import lax
from jax.experimental import pallas as pl
from jax.experimental.pallas import tpu as pltpu


def _clip_loss_kernel(scale_ref, img_ref, meg_ref, out_ref,
                      img_cache, meg_cache, row_sum_ref, col_sum_ref, acc_ref,
                      *, inv_two_b, mxu_dtype, meg_resident):
    i = pl.program_id(0)          # row tile (image rows)
    j = pl.program_id(1)          # col tile (meg rows)
    ni = pl.num_programs(0)
    nj = pl.num_programs(1)

    scale = scale_ref[0]          # exp(log_logit_scale), precomputed outside

    @pl.when((i == 0) & (j == 0))
    def _():
        acc_ref[0] = 0.0

    # --- normalize + scale-fold the image tile ONCE per row sweep ----------
    @pl.when(j == 0)
    def _():
        img = img_ref[...].astype(jnp.float32)                    # (TB, D)
        inv = lax.rsqrt(jnp.maximum(jnp.sum(img * img, axis=-1, keepdims=True),
                                    1e-24))
        img_cache[...] = (img * (scale * inv)).astype(mxu_dtype)

    img_s = img_cache[...]                                        # (TB, D)

    # --- normalized meg rows: computed once, kept VMEM-resident ------------
    if meg_resident:
        @pl.when(i == 0)
        def _():
            meg = meg_ref[...].astype(jnp.float32)                # (TB, D)
            inv = lax.rsqrt(jnp.maximum(
                jnp.sum(meg * meg, axis=-1, keepdims=True), 1e-24))
            meg_cache[j] = (meg * inv).astype(mxu_dtype)
        meg_n = meg_cache[j]                                      # (TB, D)
    else:
        # Fallback for very large B*D: stream + normalize meg per step.
        meg = meg_ref[...].astype(jnp.float32)
        inv = lax.rsqrt(jnp.maximum(jnp.sum(meg * meg, axis=-1, keepdims=True),
                                    1e-24))
        meg_n = (meg * inv).astype(mxu_dtype)

    # (TB, TB) logits tile on the MXU; contract last dims directly (no .T).
    logits = lax.dot_general(
        img_s, meg_n,
        dimension_numbers=(((1,), (1,)), ((), ())),
        preferred_element_type=jnp.float32)

    # |logits| <= scale, so a fixed shift by `scale` keeps exponents <= ~0:
    # ONE exp map feeds both the row-wise and the column-wise logsumexp.
    p = jnp.exp(logits - scale)                                   # (TB, TB)

    # --- row-wise sum-exp, accumulated across the column-tile axis j -------
    rsum = jnp.sum(p, axis=1, keepdims=True)                      # (TB, 1)

    @pl.when(j == 0)
    def _():
        row_sum_ref[...] = rsum

    @pl.when(j > 0)
    def _():
        row_sum_ref[...] += rsum

    # --- column-wise sum-exp, accumulated across the row-tile axis i -------
    csum = jnp.sum(p, axis=0, keepdims=True)                      # (1, TB)

    @pl.when(i == 0)
    def _():
        col_sum_ref[pl.ds(j, 1), :] = csum

    @pl.when(i > 0)
    def _():
        col_sum_ref[pl.ds(j, 1), :] = col_sum_ref[pl.ds(j, 1), :] + csum

    # --- diagonal (label) logits live only in tiles with i == j ------------
    @pl.when(i == j)
    def _():
        diag = jnp.sum(img_s.astype(jnp.float32) * meg_n.astype(jnp.float32))
        acc_ref[0] -= 2.0 * diag        # appears in both CE directions

    # --- finalize row LSEs once the column sweep for this row tile is done -
    @pl.when(j == nj - 1)
    def _():
        acc_ref[0] += jnp.sum(scale + jnp.log(row_sum_ref[...]))

    # --- finalize column LSEs once the row sweep for this column tile done -
    @pl.when(i == ni - 1)
    def _():
        acc_ref[0] += jnp.sum(scale + jnp.log(col_sum_ref[pl.ds(j, 1), :]))

    # --- emit the scalar loss on the very last grid step --------------------
    @pl.when((i == ni - 1) & (j == nj - 1))
    def _():
        out_ref[0] = acc_ref[0] * inv_two_b


def _vmem_capacity_bytes():
    try:
        return int(pltpu.get_tpu_info().vmem_capacity_bytes)
    except Exception:
        return 64 * 1024 * 1024   # conservative: v7x per-TensorCore VMEM


def _estimate_vmem_bytes(block_b, B, D, in_bytes, mxu_bytes, meg_resident):
    inputs = 2 * 2 * block_b * D * in_bytes          # img + meg, double-buffered
    img_cache = block_b * D * mxu_bytes
    meg_cache = (B * D * mxu_bytes) if meg_resident else (8 * 128 * mxu_bytes)
    tile_tmps = 3 * block_b * block_b * 4            # logits / exp / spare (f32)
    sums = 4 * (block_b * 128 + B)                   # row/col sum scratch (padded)
    return inputs + img_cache + meg_cache + tile_tmps + sums


def _pick_block(B, D, in_bytes, mxu_bytes, vmem_limit, meg_resident):
    """Largest MXU-friendly batch tile that divides B and fits the VMEM budget."""
    if B <= 256:
        return B

    def fits(c):
        return (B % c == 0 and
                _estimate_vmem_bytes(c, B, D, in_bytes, mxu_bytes, meg_resident)
                <= vmem_limit)

    # Prefer 256-multiples (256x256 MXU on v6e/v7x), then 128 (v5e), then any
    # multiple of 8 (layout constraint).
    for align in (256, 128, 8):
        cands = [c for c in range(align, min(B, 1024) + 1, align) if fits(c)]
        if cands:
            return max(cands)
    return B  # TODO(synk): pad/mask ragged batch tiles instead of falling back


def clip_loss(encoded_image, encoded_meg, y=None, log_logit_scale=None,
              block_b=None, allow_bf16_matmul=False, meg_resident=None):
    """Forward of CLIPLoss. `y` is accepted but unused (as in the module)."""
    del y  # unused in the PyTorch forward as well
    if log_logit_scale is None:
        log_logit_scale = float(np.log(1.0 / 0.07))

    # Fixed-shift softmax is exact/stable while exp(logits - scale) never fully
    # underflows; guard concrete scales (default CLIP init ~14.3 is fine).
    if isinstance(log_logit_scale, (int, float, np.floating)):
        assert np.exp(float(log_logit_scale)) < 40.0, (
            "logit scale too large for fixed-shift softmax; "
            "use a running-max variant")

    B, D = encoded_image.shape
    assert encoded_meg.shape == (B, D)

    # bf16 inputs -> bf16 MXU operands (full MXU rate on v6e/v7x, f32 accum);
    # f32 inputs keep f32 operands unless the caller opts into bf16 matmul.
    if encoded_image.dtype == jnp.bfloat16 or allow_bf16_matmul:
        mxu_dtype = jnp.bfloat16
    else:
        mxu_dtype = jnp.float32
    in_bytes = jnp.dtype(encoded_image.dtype).itemsize
    mxu_bytes = jnp.dtype(mxu_dtype).itemsize

    vmem_cap = _vmem_capacity_bytes()
    # ~40 MiB on v7x (64 MiB/TC), ~80 MiB on v5e/v6e (128 MiB).
    vmem_limit = max(32 * 1024 * 1024,
                     min(vmem_cap * 5 // 8, 96 * 1024 * 1024))

    # Keep the full normalized meg VMEM-resident when it fits the budget.
    if meg_resident is None:
        resident_budget = min(vmem_limit // 3, 24 * 1024 * 1024)
        meg_resident = (B * D * mxu_bytes) <= resident_budget

    if block_b is None:
        block_b = _pick_block(B, D, in_bytes, mxu_bytes, vmem_limit,
                              meg_resident)
    assert B % block_b == 0, "batch must be divisible by the batch tile"
    n_tiles = B // block_b

    # logit_scale.exp() once, shipped to the kernel as an SMEM scalar.
    scale_arr = jnp.exp(jnp.asarray(log_logit_scale, jnp.float32)).reshape(1)

    kernel = functools.partial(_clip_loss_kernel,
                               inv_two_b=float(1.0 / (2.0 * B)),
                               mxu_dtype=mxu_dtype,
                               meg_resident=meg_resident)

    if meg_resident:
        # Stream meg tiles only during the first row sweep (i == 0); afterwards
        # pin the block index to 0 so the pipeline skips the redundant DMA and
        # the kernel reads the VMEM-resident normalized cache instead.
        meg_index_map = lambda i, j: (jnp.where(i == 0, j, 0), 0)
        meg_cache_shape = (n_tiles, block_b, D)
    else:
        meg_index_map = lambda i, j: (j, 0)
        meg_cache_shape = (1, 8, 128)   # unused dummy in the fallback path

    # Both grid axes carry reductions into shared scratch (row LSEs reduce over
    # j, column LSEs and the meg cache reduce/persist over i), so both must stay
    # "arbitrary" (see v7x megacore TODO at the top of the file).
    out = pl.pallas_call(
        kernel,
        out_shape=jax.ShapeDtypeStruct((1,), jnp.float32),
        grid=(n_tiles, n_tiles),
        in_specs=[
            pl.BlockSpec(memory_space=pltpu.MemorySpace.SMEM),     # exp(scale)
            pl.BlockSpec((block_b, D), lambda i, j: (i, 0)),       # image rows
            pl.BlockSpec((block_b, D), meg_index_map),             # meg rows
        ],
        out_specs=pl.BlockSpec(memory_space=pltpu.MemorySpace.SMEM),
        scratch_shapes=[
            pltpu.VMEM((block_b, D), mxu_dtype),          # scale-folded img cache
            pltpu.VMEM(meg_cache_shape, mxu_dtype),       # normalized meg cache
            pltpu.VMEM((block_b, 1), jnp.float32),        # row sum-exp
            pltpu.VMEM((n_tiles, block_b), jnp.float32),  # col sum-exp (lane-dense)
            pltpu.SMEM((1,), jnp.float32),                # loss accumulator
        ],
        compiler_params=pltpu.CompilerParams(
            dimension_semantics=("arbitrary", "arbitrary"),
            vmem_limit_bytes=int(vmem_limit),
        ),
    )(scale_arr, encoded_image, encoded_meg)
    return out[0]


def _reference(encoded_image, encoded_meg, log_logit_scale):
    # pure-JAX reference mirroring the PyTorch module, for a sanity check
    img = encoded_image / jnp.maximum(
        jnp.linalg.norm(encoded_image, axis=-1, keepdims=True), 1e-12)
    meg = encoded_meg / jnp.maximum(
        jnp.linalg.norm(encoded_meg, axis=-1, keepdims=True), 1e-12)
    logits = jnp.exp(log_logit_scale) * img @ meg.T
    labels = jnp.arange(img.shape[0])

    def ce(lg):
        lse = jax.nn.logsumexp(lg, axis=-1)
        return jnp.mean(lse - lg[jnp.arange(lg.shape[0]), labels])

    return (ce(logits) + ce(logits.T)) / 2


if __name__ == "__main__":
    key = jax.random.PRNGKey(0)
    k1, k2, k3 = jax.random.split(key, 3)
    B, D = 32, 64
    encoded_image = jax.random.normal(k1, (B, D), dtype=jnp.float32)
    encoded_meg = jax.random.normal(k2, (B, D), dtype=jnp.float32)
    y = jax.random.normal(k3, (B, D), dtype=jnp.float32)  # unused, as in module

    log_scale = float(np.log(1.0 / 0.07))  # deterministic param init, as in module
    ref = _reference(encoded_image, encoded_meg, jnp.float32(log_scale))

    # f32 path, forced 2x2 tile grid: exercises the cached/resident code path
    # (img cache refilled per row sweep, meg cache filled at i==0, reused at i>0).
    loss = clip_loss(encoded_image, encoded_meg, y, log_scale, block_b=16)
    loss = jax.block_until_ready(loss)
    assert jnp.allclose(loss, ref, rtol=2e-4, atol=2e-4), (loss, ref)

    # Non-resident fallback path (streamed meg, per-step meg normalization).
    loss_nr = clip_loss(encoded_image, encoded_meg, y, log_scale,
                        block_b=16, meg_resident=False)
    loss_nr = jax.block_until_ready(loss_nr)
    assert jnp.allclose(loss_nr, ref, rtol=2e-4, atol=2e-4), (loss_nr, ref)

    # bf16-input path (half the HBM->VMEM bytes, bf16 MXU operands + bf16 caches).
    loss_bf16 = clip_loss(encoded_image.astype(jnp.bfloat16),
                          encoded_meg.astype(jnp.bfloat16), y, log_scale)
    loss_bf16 = jax.block_until_ready(loss_bf16)
    assert jnp.allclose(loss_bf16, ref, rtol=0.0, atol=5e-2), (loss_bf16, ref)

    print("KERNEL_OK")
</pallas_src>

<mosaic_0001>
module attributes {stable_mosaic.version = 11 : i64} {
  func.func @_clip_loss_kernel(%arg0: i32, %arg1: i32, %arg2: memref<1xf32, #tpu.memory_space<smem>>, %arg3: memref<16x64xf32, #tpu.memory_space<vmem>>, %arg4: memref<16x64xf32, #tpu.memory_space<vmem>>, %arg5: memref<1xf32, #tpu.memory_space<smem>>, %arg6: memref<16x64xf32, #tpu.memory_space<vmem>>, %arg7: memref<2x16x64xf32, #tpu.memory_space<vmem>>, %arg8: memref<16x1xf32, #tpu.memory_space<vmem>>, %arg9: memref<2x16xf32, #tpu.memory_space<vmem>>, %arg10: memref<1xf32, #tpu.memory_space<smem>>) attributes {dimension_semantics = [#tpu.dimension_semantics<arbitrary>, #tpu.dimension_semantics<arbitrary>], iteration_bounds = array<i64: 2, 2>, scalar_prefetch = 0 : i64, scratch_operands = 5 : i64, tpu.core_type = #tpu.core_type<tc>, window_params = [{transform_indices = @transform_0, window_bounds = array<i64: 1>}, {transform_indices = @transform_1, window_bounds = array<i64: 16, 64>}, {transform_indices = @transform_2, window_bounds = array<i64: 16, 64>}, {transform_indices = @transform_3, window_bounds = array<i64: 1>}]} {
    %c0 = arith.constant 0 : index
    %0 = memref.load %arg2[%c0] : memref<1xf32, #tpu.memory_space<smem>>
    %c0_i32 = arith.constant 0 : i32
    %1 = arith.cmpi eq, %arg0, %c0_i32 : i32
    %c0_i32_0 = arith.constant 0 : i32
    %2 = arith.cmpi eq, %arg1, %c0_i32_0 : i32
    %3 = arith.andi %1, %2 : i1
    %4 = arith.extui %3 : i1 to i32
    %c0_i32_1 = arith.constant 0 : i32
    %5 = arith.cmpi ne, %4, %c0_i32_1 : i32
    scf.if %5 {
      %cst_27 = arith.constant 0.000000e+00 : f32
      %c0_28 = arith.constant 0 : index
      %50 = memref.load %arg10[%c0_28] : memref<1xf32, #tpu.memory_space<smem>>
      memref.store %cst_27, %arg10[%c0_28] : memref<1xf32, #tpu.memory_space<smem>>
    } else {
    }
    %c0_i32_2 = arith.constant 0 : i32
    %6 = arith.cmpi eq, %arg1, %c0_i32_2 : i32
    %7 = arith.extui %6 : i1 to i32
    %c0_i32_3 = arith.constant 0 : i32
    %8 = arith.cmpi ne, %7, %c0_i32_3 : i32
    scf.if %8 {
      %c0_27 = arith.constant 0 : index
      %c0_28 = arith.constant 0 : index
      %50 = vector.load %arg3[%c0_27, %c0_28] : memref<16x64xf32, #tpu.memory_space<vmem>>, vector<16x64xf32>
      %51 = arith.mulf %50, %50 : vector<16x64xf32>
      %cst_29 = arith.constant dense<0.000000e+00> : vector<16xf32>
      %52 = vector.multi_reduction <add>, %51, %cst_29 [1] : vector<16x64xf32> to vector<16xf32>
      %53 = vector.shape_cast %52 : vector<16xf32> to vector<16x1xf32>
      %cst_30 = arith.constant 1.000000e-24 : f32
      %54 = vector.broadcast %cst_30 : f32 to vector<16x1xf32>
      %55 = arith.maximumf %53, %54 : vector<16x1xf32>
      %56 = math.rsqrt %55 : vector<16x1xf32>
      %57 = vector.broadcast %0 : f32 to vector<16x1xf32>
      %58 = arith.mulf %57, %56 : vector<16x1xf32>
      %59 = vector.broadcast %58 : vector<16x1xf32> to vector<16x64xf32>
      %60 = arith.mulf %50, %59 : vector<16x64xf32>
      %c0_31 = arith.constant 0 : index
      %c0_32 = arith.constant 0 : index
      %61 = vector.load %arg6[%c0_31, %c0_32] : memref<16x64xf32, #tpu.memory_space<vmem>>, vector<16x64xf32>
      tpu.vector_store %arg6[%c0_31, %c0_32], %60 {strides = array<i32>} : memref<16x64xf32, #tpu.memory_space<vmem>>, vector<16x64xf32>,
    } else {
    }
    %c0_4 = arith.constant 0 : index
    %c0_5 = arith.constant 0 : index
    %9 = vector.load %arg6[%c0_4, %c0_5] : memref<16x64xf32, #tpu.memory_space<vmem>>, vector<16x64xf32>
    %c0_i32_6 = arith.constant 0 : i32
    %10 = arith.cmpi eq, %arg0, %c0_i32_6 : i32
    %11 = arith.extui %10 : i1 to i32
    %c0_i32_7 = arith.constant 0 : i32
    %12 = arith.cmpi ne, %11, %c0_i32_7 : i32
    scf.if %12 {
      %c0_27 = arith.constant 0 : index
      %c0_28 = arith.constant 0 : index
      %50 = vector.load %arg4[%c0_27, %c0_28] : memref<16x64xf32, #tpu.memory_space<vmem>>, vector<16x64xf32>
      %51 = arith.mulf %50, %50 : vector<16x64xf32>
      %cst_29 = arith.constant dense<0.000000e+00> : vector<16xf32>
      %52 = vector.multi_reduction <add>, %51, %cst_29 [1] : vector<16x64xf32> to vector<16xf32>
      %53 = vector.shape_cast %52 : vector<16xf32> to vector<16x1xf32>
      %cst_30 = arith.constant 1.000000e-24 : f32
      %54 = vector.broadcast %cst_30 : f32 to vector<16x1xf32>
      %55 = arith.maximumf %53, %54 : vector<16x1xf32>
      %56 = math.rsqrt %55 : vector<16x1xf32>
      %57 = vector.broadcast %56 : vector<16x1xf32> to vector<16x64xf32>
      %58 = arith.mulf %50, %57 : vector<16x64xf32>
      %59 = arith.index_cast %arg1 : i32 to index
      %c0_31 = arith.constant 0 : index
      %c0_32 = arith.constant 0 : index
      %60 = vector.load %arg7[%59, %c0_31, %c0_32] : memref<2x16x64xf32, #tpu.memory_space<vmem>>, vector<1x16x64xf32>
      %61 = vector.shape_cast %60 : vector<1x16x64xf32> to vector<16x64xf32>
      %62 = vector.shape_cast %58 : vector<16x64xf32> to vector<1x16x64xf32>
      tpu.vector_store %arg7[%59, %c0_31, %c0_32], %62 {strides = array<i32>} : memref<2x16x64xf32, #tpu.memory_space<vmem>>, vector<1x16x64xf32>,
    } else {
    }
    %13 = arith.index_cast %arg1 : i32 to index
    %c0_8 = arith.constant 0 : index
    %c0_9 = arith.constant 0 : index
    %14 = vector.load %arg7[%13, %c0_8, %c0_9] : memref<2x16x64xf32, #tpu.memory_space<vmem>>, vector<1x16x64xf32>
    %15 = vector.shape_cast %14 : vector<1x16x64xf32> to vector<16x64xf32>
    %cst = arith.constant dense<0.000000e+00> : vector<16x16xf32>
    %16 = tpu.matmul %9, %15, %cst {dimension_numbers = #tpu.dot_dimension_numbers<[1], [1], [0], [0], [0, 0, 1, 0], [], []>} : vector<16x64xf32>, vector<16x64xf32>, vector<16x16xf32> -> vector<16x16xf32>
    %17 = vector.broadcast %0 : f32 to vector<16x16xf32>
    %18 = arith.subf %16, %17 : vector<16x16xf32>
    %19 = math.exp %18 : vector<16x16xf32>
    %cst_10 = arith.constant dense<0.000000e+00> : vector<16xf32>
    %20 = vector.multi_reduction <add>, %19, %cst_10 [1] : vector<16x16xf32> to vector<16xf32>
    %21 = vector.shape_cast %20 : vector<16xf32> to vector<16x1xf32>
    %c0_i32_11 = arith.constant 0 : i32
    %22 = arith.cmpi eq, %arg1, %c0_i32_11 : i32
    %23 = arith.extui %22 : i1 to i32
    %c0_i32_12 = arith.constant 0 : i32
    %24 = arith.cmpi ne, %23, %c0_i32_12 : i32
    scf.if %24 {
      %c0_27 = arith.constant 0 : index
      %c0_28 = arith.constant 0 : index
      %50 = vector.load %arg8[%c0_27, %c0_28] : memref<16x1xf32, #tpu.memory_space<vmem>>, vector<16x1xf32>
      tpu.vector_store %arg8[%c0_27, %c0_28], %21 {strides = array<i32>} : memref<16x1xf32, #tpu.memory_space<vmem>>, vector<16x1xf32>,
    } else {
    }
    %c0_i32_13 = arith.constant 0 : i32
    %25 = arith.cmpi sgt, %arg1, %c0_i32_13 : i32
    %26 = arith.extui %25 : i1 to i32
    %c0_i32_14 = arith.constant 0 : i32
    %27 = arith.cmpi ne, %26, %c0_i32_14 : i32
    scf.if %27 {
      %c0_27 = arith.constant 0 : index
      %c0_28 = arith.constant 0 : index
      %50 = vector.load %arg8[%c0_27, %c0_28] : memref<16x1xf32, #tpu.memory_space<vmem>>, vector<16x1xf32>
      %51 = arith.addf %50, %21 : vector<16x1xf32>
      %c0_29 = arith.constant 0 : index
      %c0_30 = arith.constant 0 : index
      %52 = vector.load %arg8[%c0_29, %c0_30] : memref<16x1xf32, #tpu.memory_space<vmem>>, vector<16x1xf32>
      tpu.vector_store %arg8[%c0_29, %c0_30], %51 {strides = array<i32>} : memref<16x1xf32, #tpu.memory_space<vmem>>, vector<16x1xf32>,
    } else {
    }
    %cst_15 = arith.constant dense<0.000000e+00> : vector<16xf32>
    %28 = vector.multi_reduction <add>, %19, %cst_15 [0] : vector<16x16xf32> to vector<16xf32>
    %29 = vector.shape_cast %28 : vector<16xf32> to vector<1x16xf32>
    %c0_i32_16 = arith.constant 0 : i32
    %30 = arith.cmpi eq, %arg0, %c0_i32_16 : i32
    %31 = arith.extui %30 : i1 to i32
    %c0_i32_17 = arith.constant 0 : i32
    %32 = arith.cmpi ne, %31, %c0_i32_17 : i32
    scf.if %32 {
      %50 = arith.index_cast %arg1 : i32 to index
      %c0_27 = arith.constant 0 : index
      %51 = vector.load %arg9[%50, %c0_27] : memref<2x16xf32, #tpu.memory_space<vmem>>, vector<1x16xf32>
      tpu.vector_store %arg9[%50, %c0_27], %29 {strides = array<i32>} : memref<2x16xf32, #tpu.memory_space<vmem>>, vector<1x16xf32>,
    } else {
    }
    %c0_i32_18 = arith.constant 0 : i32
    %33 = arith.cmpi sgt, %arg0, %c0_i32_18 : i32
    %34 = arith.extui %33 : i1 to i32
    %c0_i32_19 = arith.constant 0 : i32
    %35 = arith.cmpi ne, %34, %c0_i32_19 : i32
    scf.if %35 {
      %50 = arith.index_cast %arg1 : i32 to index
      %c0_27 = arith.constant 0 : index
      %51 = vector.load %arg9[%50, %c0_27] : memref<2x16xf32, #tpu.memory_space<vmem>>, vector<1x16xf32>
      %52 = arith.addf %51, %29 : vector<1x16xf32>
      %53 = arith.index_cast %arg1 : i32 to index
      %c0_28 = arith.constant 0 : index
      %54 = vector.load %arg9[%53, %c0_28] : memref<2x16xf32, #tpu.memory_space<vmem>>, vector<1x16xf32>
      tpu.vector_store %arg9[%53, %c0_28], %52 {strides = array<i32>} : memref<2x16xf32, #tpu.memory_space<vmem>>, vector<1x16xf32>,
    } else {
    }
    %36 = arith.cmpi eq, %arg0, %arg1 : i32
    %37 = arith.extui %36 : i1 to i32
    %c0_i32_20 = arith.constant 0 : i32
    %38 = arith.cmpi ne, %37, %c0_i32_20 : i32
    scf.if %38 {
      %50 = arith.mulf %9, %15 : vector<16x64xf32>
      %51 = vector.shape_cast %50 : vector<16x64xf32> to vector<1x16x64xf32>
      %cst_27 = arith.constant dense<0.000000e+00> : vector<1xf32>
      %52 = vector.multi_reduction <add>, %51, %cst_27 [1, 2] : vector<1x16x64xf32> to vector<1xf32>
      %53 = vector.shape_cast %52 : vector<1xf32> to vector<1x1x1xf32>
      %54 = vector.extract %53[0, 0, 0] : f32 from vector<1x1x1xf32>
      %c0_28 = arith.constant 0 : index
      %55 = memref.load %arg10[%c0_28] : memref<1xf32, #tpu.memory_space<smem>>
      %cst_29 = arith.constant 2.000000e+00 : f32
      %56 = arith.mulf %cst_29, %54 : f32
      %57 = arith.subf %55, %56 : f32
      %c0_30 = arith.constant 0 : index
      %58 = memref.load %arg10[%c0_30] : memref<1xf32, #tpu.memory_space<smem>>
      memref.store %57, %arg10[%c0_30] : memref<1xf32, #tpu.memory_space<smem>>
    } else {
    }
    %c1_i32 = arith.constant 1 : i32
    %39 = arith.cmpi eq, %arg1, %c1_i32 : i32
    %40 = arith.extui %39 : i1 to i32
    %c0_i32_21 = arith.constant 0 : i32
    %41 = arith.cmpi ne, %40, %c0_i32_21 : i32
    scf.if %41 {
      %c0_27 = arith.constant 0 : index
      %50 = memref.load %arg10[%c0_27] : memref<1xf32, #tpu.memory_space<smem>>
      %c0_28 = arith.constant 0 : index
      %c0_29 = arith.constant 0 : index
      %51 = vector.load %arg8[%c0_28, %c0_29] : memref<16x1xf32, #tpu.memory_space<vmem>>, vector<16x1xf32>
      %52 = math.log %51 : vector<16x1xf32>
      %53 = vector.broadcast %0 : f32 to vector<16x1xf32>
      %54 = arith.addf %53, %52 : vector<16x1xf32>
      %55 = vector.shape_cast %54 : vector<16x1xf32> to vector<1x16x1xf32>
      %cst_30 = arith.constant dense<0.000000e+00> : vector<1xf32>
      %56 = vector.multi_reduction <add>, %55, %cst_30 [1, 2] : vector<1x16x1xf32> to vector<1xf32>
      %57 = vector.shape_cast %56 : vector<1xf32> to vector<1x1x1xf32>
      %58 = vector.extract %57[0, 0, 0] : f32 from vector<1x1x1xf32>
      %59 = arith.addf %50, %58 : f32
      %c0_31 = arith.constant 0 : index
      %60 = memref.load %arg10[%c0_31] : memref<1xf32, #tpu.memory_space<smem>>
      memref.store %59, %arg10[%c0_31] : memref<1xf32, #tpu.memory_space<smem>>
    } else {
    }
    %c1_i32_22 = arith.constant 1 : i32
    %42 = arith.cmpi eq, %arg0, %c1_i32_22 : i32
    %43 = arith.extui %42 : i1 to i32
    %c0_i32_23 = arith.constant 0 : i32
    %44 = arith.cmpi ne, %43, %c0_i32_23 : i32
    scf.if %44 {
      %c0_27 = arith.constant 0 : index
      %50 = memref.load %arg10[%c0_27] : memref<1xf32, #tpu.memory_space<smem>>
      %51 = arith.index_cast %arg1 : i32 to index
      %c0_28 = arith.constant 0 : index
      %52 = vector.load %arg9[%51, %c0_28] : memref<2x16xf32, #tpu.memory_space<vmem>>, vector<1x16xf32>
      %53 = math.log %52 : vector<1x16xf32>
      %54 = vector.broadcast %0 : f32 to vector<1x16xf32>
      %55 = arith.addf %54, %53 : vector<1x16xf32>
      %56 = vector.shape_cast %55 : vector<1x16xf32> to vector<1x1x16xf32>
      %cst_29 = arith.constant dense<0.000000e+00> : vector<1xf32>
      %57 = vector.multi_reduction <add>, %56, %cst_29 [1, 2] : vector<1x1x16xf32> to vector<1xf32>
      %58 = vector.shape_cast %57 : vector<1xf32> to vector<1x1x1xf32>
      %59 = vector.extract %58[0, 0, 0] : f32 from vector<1x1x1xf32>
      %60 = arith.addf %50, %59 : f32
      %c0_30 = arith.constant 0 : index
      %61 = memref.load %arg10[%c0_30] : memref<1xf32, #tpu.memory_space<smem>>
      memref.store %60, %arg10[%c0_30] : memref<1xf32, #tpu.memory_space<smem>>
    } else {
    }
    %c1_i32_24 = arith.constant 1 : i32
    %45 = arith.cmpi eq, %arg0, %c1_i32_24 : i32
    %c1_i32_25 = arith.constant 1 : i32
    %46 = arith.cmpi eq, %arg1, %c1_i32_25 : i32
    %47 = arith.andi %45, %46 : i1
    %48 = arith.extui %47 : i1 to i32
    %c0_i32_26 = arith.constant 0 : i32
    %49 = arith.cmpi ne, %48, %c0_i32_26 : i32
    scf.if %49 {
      %c0_27 = arith.constant 0 : index
      %50 = memref.load %arg10[%c0_27] : memref<1xf32, #tpu.memory_space<smem>>
      %cst_28 = arith.constant 1.562500e-02 : f32
      %51 = arith.mulf %50, %cst_28 : f32
      %c0_29 = arith.constant 0 : index
      %52 = memref.load %arg5[%c0_29] : memref<1xf32, #tpu.memory_space<smem>>
      memref.store %51, %arg5[%c0_29] : memref<1xf32, #tpu.memory_space<smem>>
    } else {
    }
    return
  }
  func.func @transform_0(%arg0: i32, %arg1: i32) -> i32 {
    %c0_i32 = arith.constant 0 : i32
    %c0_i32_0 = arith.constant 0 : i32
    return %c0_i32 : i32
  }
  func.func @transform_1(%arg0: i32, %arg1: i32) -> (i32, i32) {
    %c0_i32 = arith.constant 0 : i32
    %c0_i32_0 = arith.constant 0 : i32
    return %arg0, %c0_i32 : i32, i32
  }
  func.func @transform_2(%arg0: i32, %arg1: i32) -> (i32, i32) {
    %c0_i32 = arith.constant 0 : i32
    %0 = arith.cmpi eq, %arg0, %c0_i32 : i32
    %c0_i32_0 = arith.constant 0 : i32
    %1 = arith.select %0, %arg1, %c0_i32_0 : i32
    %c0_i32_1 = arith.constant 0 : i32
    %c0_i32_2 = arith.constant 0 : i32
    return %1, %c0_i32_1 : i32, i32
  }
  func.func @transform_3(%arg0: i32, %arg1: i32) -> i32 {
    %c0_i32 = arith.constant 0 : i32
    %c0_i32_0 = arith.constant 0 : i32
    return %c0_i32 : i32
  }
}

</mosaic_0001>

<llo_original>
// kernel: tpu_custom_call.1
$region0: #{tpu_custom_call.1}
  #allocation0 [shape = 'u32[]', space=smem, size = 0x4, offset = 0x4, fixed_abs, tag = 'smem constant byte address 0x4 - core index']
  #allocation1 [shape = 'u32[144,128]{1,0:T(1,128)}', space=vmem, size = 0x12000, scoped, tag = 'internal scratch']
  #allocation2 [shape = 'f32[16,64]{1,0:T(8,128)}', space=vmem, size = 0x2000, scoped, tag = 'scratch operand']
  #allocation3 [shape = 'f32[2,16,64]{2,1,0:T(8,128)}', space=vmem, size = 0x4000, scoped, tag = 'scratch operand']
  #allocation4 [shape = 'f32[16,1]{1,0:T(8,128)}', space=vmem, size = 0x2000, scoped, tag = 'scratch operand']
  #allocation5 [shape = 'f32[2,16]{1,0:T(2,128)}', space=vmem, size = 0x400, scoped, tag = 'scratch operand']
  #allocation6 [shape = 'f32[1]{0:T(128)}', space=smem, size = 0x200, scoped, tag = 'scratch operand']
  #allocation7 [shape = 'f32[1]{0:T(128)S(6)}', space=smem, size = 0x200, scoped, tag = 'scoped memory for tpu_custom_call.1']
  %s0 = inlined_call_operand.<no memory space> [shape: f32[1], index: 0, kind: input, shape index: {}]
  %s1 = inlined_call_operand.hbm [shape: f32[32,64], index: 1, kind: input, shape index: {}]
  %s2 = inlined_call_operand.hbm [shape: f32[32,64], index: 2, kind: input, shape index: {}]
  %s3 = inlined_call_operand.hbm [shape: f32[1], index: 3, kind: output, shape index: {}]
  %s4 = sld [smem:[#allocation0]]
  $region97: #{tpu_custom_call.1} parent=0
    _
  %s6 = ssub.s32 1, %s4
  %s7 = scalar_select 0, %s6, %s4
  %8 = sst [smem:[#allocation7]] %s0
  $region1: #{tpu_custom_call.1} parent=0
    #allocation8 [shape = 'u8[16384]{0}', space=vmem, size = 0x4000, scoped, tag = 'input window, operand 1']
    #allocation9 [shape = 's32[2]{0}', space=sflag, size = 0x8, scoped, tag = 'scoped memory for tpu_custom_call.1']
    #allocation10 [shape = 's32[2]{0}', space=sflag, size = 0x8, scoped, tag = 'scoped memory for tpu_custom_call.1']
    #allocation11 [shape = 'u8[16384]{0}', space=vmem, size = 0x4000, scoped, tag = 'input window, operand 2']
    #allocation12 [shape = 's32[2]{0}', space=sflag, size = 0x8, scoped, tag = 'scoped memory for tpu_custom_call.1']
    #allocation13 [shape = 'u8[512]{0}', space=smem, size = 0x200, scoped, tag = 'output window, operand 0, single buffered']
    %9 = vsyncpa [#allocation9], 0
    %s10 = scalar_lea.sflag [#allocation9], 1
    %11 = vsyncpa %s10, 0
    %12 = vsyncpa [#allocation12], 0
    %s13 = scalar_lea.sflag [#allocation12], 1
    %14 = vsyncpa %s13, 0
    %15 = vsyncpa [#allocation10], 0
    loop: start=0, step=1, limit=6
    $region2: #{tpu_custom_call.1} parent=1 // loop_pre_header
      _
    $region3: #{tpu_custom_call.1} parent=1 // loop_header
      %s17 = sphi 0, %s21
      %p18 = scmp.ge.s32.totalorder %s17, 6
      %s24 = sphi 0, %s36
      %s25 = sphi 0, %s32
      %s26 = sphi 0, %s24
      %s27 = sphi 0, %s25
      %s28 = sphi 0, %s26
      %s29 = sphi 0, %s27
      %s37 = sphi 0, %s37
      %s39 = sphi 0, %s37
      %s40 = sphi 0, %s39
      %s54 = sphi 0, %s40
      %s60 = sphi 0, %s62
      %s63 = sphi 0, %s60
      %s64 = sphi 0, %s63
      %s80 = sphi 0, %s64
      %s90 = sphi 0, %s92
      %s93 = sphi 0, %s90
      %s94 = sphi 0, %s93
      %s110 = sphi 0, %s94
      %s114 = sphi 0, %s114
      %s116 = sphi 0, %s114
      %s117 = sphi 0, %s116
      %s131 = sphi 0, %s117
    $region4: #{tpu_custom_call.1} parent=1 // loop_header_branch
      %20 = sbr.rel (%p18) target = $region8
    $region5: #{tpu_custom_call.1} parent=1 // loop_body
      %s22 = ssub.s32 %s17, 1
      %s23 = ssub.s32 %s17, 2
      %s30 = sadd.s32 1, %s25
      %p31 = scmp.ge.s32.totalorder %s30, 2
      %s32 = scalar_select %p31, 0, %s30
      %s33 = sadd.s32 1, %s24
      %s34 = scalar_select %p31, %s33, %s24
      %p35 = scmp.ge.s32.totalorder %s34, 2
      %s36 = scalar_select %p35, 0, %s34
      %s38 = sadd.s32 %s37, 1
      %p41 = scmp.eq.s32.totalorder %s17, 3
      %p42 = scmp.ne.s32.totalorder %s37, %s39
      %p43 = scmp.eq.s32.totalorder %s17, 0
      %p44 = por %p42, %p43
      %p45 = scmp.ne.s32.totalorder %s37, %s39
      %p46 = scmp.eq.s32.totalorder %s22, 3
      %p47 = por %p45, %p46
      %p48 = scmp.ne.s32.totalorder %s39, %s40
      %p49 = scmp.eq.s32.totalorder %s22, 0
      %p50 = por %p48, %p49
      %p51 = scmp.ne.s32.totalorder %s39, %s40
      %p52 = scmp.eq.s32.totalorder %s23, 3
      %p53 = por %p51, %p52
      %p55 = scmp.ne.s32.totalorder %s40, %s54
      %p56 = scmp.eq.s32.totalorder %s23, 0
      %p57 = por %p55, %p56
      %s58 = ssub.s32 %s24, %s36
      %p59 = scmp.eq.s32.totalorder %s58, 0
      %s61 = sadd.s32 %s60, 1
      %s62 = scalar_select %p59, %s60, %s61
      %p65 = pneg %p59
      %p66 = scmp.eq.s32.totalorder %s17, 3
      %p67 = por %p65, %p66
      %p68 = scmp.ne.s32.totalorder %s60, %s63
      %p69 = scmp.eq.s32.totalorder %s17, 0
      %p70 = por %p68, %p69
      %p71 = scmp.ne.s32.totalorder %s60, %s63
      %p72 = scmp.eq.s32.totalorder %s22, 3
      %p73 = por %p71, %p72
      %p74 = scmp.ne.s32.totalorder %s63, %s64
      %p75 = scmp.eq.s32.totalorder %s22, 0
      %p76 = por %p74, %p75
      %p77 = scmp.ne.s32.totalorder %s63, %s64
      %p78 = scmp.eq.s32.totalorder %s23, 3
      %p79 = por %p77, %p78
      %p81 = scmp.ne.s32.totalorder %s64, %s80
      %p82 = scmp.eq.s32.totalorder %s23, 0
      %p83 = por %p81, %p82
      %p84 = scmp.eq.s32.totalorder %s24, 0
      %s85 = scalar_select %p84, %s25, 0
      %p86 = scmp.eq.s32.totalorder %s36, 0
      %s87 = scalar_select %p86, %s32, 0
      %s88 = ssub.s32 %s85, %s87
      %p89 = scmp.eq.s32.totalorder %s88, 0
      %s91 = sadd.s32 %s90, 1
      %s92 = scalar_select %p89, %s90, %s91
      %p95 = pneg %p89
      %p96 = scmp.eq.s32.totalorder %s17, 3
      %p97 = por %p95, %p96
      %p98 = scmp.ne.s32.totalorder %s90, %s93
      %p99 = scmp.eq.s32.totalorder %s17, 0
      %p100 = por %p98, %p99
      %p101 = scmp.ne.s32.totalorder %s90, %s93
      %p102 = scmp.eq.s32.totalorder %s22, 3
      %p103 = por %p101, %p102
      %p104 = scmp.ne.s32.totalorder %s93, %s94
      %p105 = scmp.eq.s32.totalorder %s22, 0
      %p106 = por %p104, %p105
      %p107 = scmp.ne.s32.totalorder %s93, %s94
      %p108 = scmp.eq.s32.totalorder %s23, 3
      %p109 = por %p107, %p108
      %p111 = scmp.ne.s32.totalorder %s94, %s110
      %p112 = scmp.eq.s32.totalorder %s23, 0
      %p113 = por %p111, %p112
      %s115 = sadd.s32 %s114, 1
      %p118 = scmp.eq.s32.totalorder %s17, 3
      %p119 = scmp.ne.s32.totalorder %s114, %s116
      %p120 = scmp.eq.s32.totalorder %s17, 0
      %p121 = por %p119, %p120
      %p122 = scmp.ne.s32.totalorder %s114, %s116
      %p123 = scmp.eq.s32.totalorder %s22, 3
      %p124 = por %p122, %p123
      %p125 = scmp.ne.s32.totalorder %s116, %s117
      %p126 = scmp.eq.s32.totalorder %s22, 0
      %p127 = por %p125, %p126
      %p128 = scmp.ne.s32.totalorder %s116, %s117
      %p129 = scmp.eq.s32.totalorder %s23, 3
      %p130 = por %p128, %p129
      %p132 = scmp.ne.s32.totalorder %s117, %s131
      %p133 = scmp.eq.s32.totalorder %s23, 0
      %p134 = por %p132, %p133
      %p135 = scmp.le.s32.totalorder 1, %s17
      %p136 = scmp.lt.s32.totalorder %s17, 5
      %p137 = pnand %p135, %p136
      %p138 = pneg %p137
      // Predicated region
      $region9: #{tpu_custom_call.1} parent=5 // pred_check
        _
      $region10: #{tpu_custom_call.1} parent=5 // pred_check_branch
        %140 = sbr.rel (%p137) target = $region12
      $region11: #{tpu_custom_call.1} parent=5 // pred_region
        %s141 = ssub.s32 %s17, 1
        // Predicated region
        $region13: #{tpu_custom_call.1} parent=11 // pred_check
          %p142 = pneg %p50
        $region14: #{tpu_custom_call.1} parent=11 // pred_check_branch
          %144 = sbr.rel (%p142) target = $region16
        $region15: #{tpu_custom_call.1} parent=11 // pred_region
          _
        $region16: #{tpu_custom_call.1} parent=11 // pred_fallthru
          _
      $region12: #{tpu_custom_call.1} parent=5 // pred_fallthru
        _
      %p145 = scmp.lt.s32.totalorder %s17, 4
      // Predicated region
      $region17: #{tpu_custom_call.1} parent=5 // pred_check
        %p146 = pneg %p145
      $region18: #{tpu_custom_call.1} parent=5 // pred_check_branch
        %148 = sbr.rel (%p146) target = $region20
      $region19: #{tpu_custom_call.1} parent=5 // pred_region
        // Predicated region
        $region21: #{tpu_custom_call.1} parent=19 // pred_check
          %p149 = pneg %p70
        $region22: #{tpu_custom_call.1} parent=19 // pred_check_branch
          %151 = sbr.rel (%p149) target = $region24
        $region23: #{tpu_custom_call.1} parent=19 // pred_region
          %s152 = sand.u32 %s60, 1
          %s153 = scalar_lea.sflag [#allocation9], %s152
          %s154 = sand.u32 %s60, 1
          %s155 = smul.addr %s154, 16
          %s156 = scalar_lea.vmem [#allocation8], %s155
          %s157 = smul.u32 2, %s24
          %s159 = ssub.s32 256, 256
          %160 = vsyncadd %s153, %s159
          %s161 = smul.addr %s157, 128
          %s162 = scalar_lea.hbm %s1, %s161
          %s163 = sshll.u32 %s156, 4
          %s164 = int_to_ptr.vmem [resolvable:$true] %s163
          %169 = dma.hbm_to_vmem [thread:$0]  %s162, 256, %s164, %s153, 128, 128, 8
        $region24: #{tpu_custom_call.1} parent=19 // pred_fallthru
          _
        // Predicated region
        $region25: #{tpu_custom_call.1} parent=19 // pred_check
          %p170 = pneg %p100
        $region26: #{tpu_custom_call.1} parent=19 // pred_check_branch
          %172 = sbr.rel (%p170) target = $region28
        $region27: #{tpu_custom_call.1} parent=19 // pred_region
          %s173 = sand.u32 %s90, 1
          %s174 = scalar_lea.sflag [#allocation12], %s173
          %s175 = sand.u32 %s90, 1
          %s176 = smul.addr %s175, 16
          %s177 = scalar_lea.vmem [#allocation11], %s176
          %p178 = scmp.eq.s32.totalorder %s24, 0
          %s179 = scalar_select %p178, %s25, 0
          %s180 = smul.u32 2, %s179
          %s182 = ssub.s32 256, 256
          %183 = vsyncadd %s174, %s182
          %s184 = smul.addr %s180, 128
          %s185 = scalar_lea.hbm %s2, %s184
          %s186 = sshll.u32 %s177, 4
          %s187 = int_to_ptr.vmem [resolvable:$true] %s186
          %192 = dma.hbm_to_vmem [thread:$0]  %s185, 256, %s187, %s174, 128, 128, 8
        $region28: #{tpu_custom_call.1} parent=19 // pred_fallthru
          _
      $region20: #{tpu_custom_call.1} parent=5 // pred_fallthru
        _
      %p193 = scmp.le.s32.totalorder 1, %s17
      %p194 = scmp.lt.s32.totalorder %s17, 5
      %p195 = pnand %p193, %p194
      %p196 = pneg %p195
      // Predicated region
      $region29: #{tpu_custom_call.1} parent=5 // pred_check
        _
      $region30: #{tpu_custom_call.1} parent=5 // pred_check_branch
        %198 = sbr.rel (%p195) target = $region32
      $region31: #{tpu_custom_call.1} parent=5 // pred_region
        %s199 = ssub.s32 %s17, 1
        %s200 = sand.u32 %s63, 1
        %s201 = scalar_lea.sflag [#allocation9], %s200
        %s202 = sand.u32 %s63, 1
        %s203 = smul.addr %s202, 16
        %s204 = scalar_lea.vmem [#allocation8], %s203
        // Predicated region
        $region33: #{tpu_custom_call.1} parent=31 // pred_check
          %p205 = pneg %p76
        $region34: #{tpu_custom_call.1} parent=31 // pred_check_branch
          %207 = sbr.rel (%p205) target = $region36
        $region35: #{tpu_custom_call.1} parent=31 // pred_region
          %208 = dma.done %s201, 256
        $region36: #{tpu_custom_call.1} parent=31 // pred_fallthru
          _
        %s209 = sand.u32 %s93, 1
        %s210 = scalar_lea.sflag [#allocation12], %s209
        %s211 = sand.u32 %s93, 1
        %s212 = smul.addr %s211, 16
        %s213 = scalar_lea.vmem [#allocation11], %s212
        // Predicated region
        $region37: #{tpu_custom_call.1} parent=31 // pred_check
          %p214 = pneg %p106
        $region38: #{tpu_custom_call.1} parent=31 // pred_check_branch
          %216 = sbr.rel (%p214) target = $region40
        $region39: #{tpu_custom_call.1} parent=31 // pred_region
          %217 = dma.done %s210, 256
        $region40: #{tpu_custom_call.1} parent=31 // pred_fallthru
          _
        %p218 = pneg %p50
        %p219 = pneg %p47
        %s220 = sand.u32 %s63, 1
        %s221 = scalar_lea.sflag [#allocation9], %s220
        %s222 = sand.u32 %s63, 1
        %s223 = smul.addr %s222, 16
        %s224 = scalar_lea.vmem [#allocation8], %s223
        %p225 = pneg %p76
        %p226 = pneg %p73
        %s227 = sand.u32 %s93, 1
        %s228 = scalar_lea.sflag [#allocation12], %s227
        %s229 = sand.u32 %s93, 1
        %s230 = smul.addr %s229, 16
        %s231 = scalar_lea.vmem [#allocation11], %s230
        %p232 = pneg %p106
        %p233 = pneg %p103
        %p234 = pneg %p127
        %p235 = pneg %p124
        %s236 = smul.u32 2, %s26
        %p237 = scmp.eq.s32.totalorder %s26, 0
        %s238 = scalar_select %p237, %s27, 0
        %s239 = smul.u32 2, %s238
        %s240 = sld [smem:[#allocation7]]
        %p241 = scmp.eq.s32.totalorder %s26, 0
        %p242 = scmp.eq.s32.totalorder %s27, 0
        %p243 = pnand %p241, %p242
        %p244 = pneg %p243
        // Predicated region
        $region41: #{tpu_custom_call.1} parent=31 // pred_check
          _
        $region42: #{tpu_custom_call.1} parent=31 // pred_check_branch
          %246 = sbr.rel (%p243) target = $region44
        $region43: #{tpu_custom_call.1} parent=31 // pred_region
          %s247 = scalar_lea.smem [#allocation6], 0
          %248 = sst [smem:[%s247]] 0.0
        $region44: #{tpu_custom_call.1} parent=31 // pred_fallthru
          _
        // Predicated region
        $region45: #{tpu_custom_call.1} parent=31 // pred_check
          %p249 = pneg %p242
        $region46: #{tpu_custom_call.1} parent=31 // pred_check_branch
          %251 = sbr.rel (%p249) target = $region48
        $region47: #{tpu_custom_call.1} parent=31 // pred_region
          %v252 = vld [vmem:[%s204] sm:$0xff]
          %v253 = vld [vmem:[%s204 + $0x8] sm:$0xff]
          %v254 = vmul.f32 %v252, %v252
          %v255 = vmul.f32 %v253, %v253
          %vm256 = vcmask 523264
          %v257 = vsel %vm256, %v254, 0.0
          %258 = vadd.xlane.f32.xlu0 %v257
          %v259 = vpop.xlane.xlu0 %258
          %v260 = vsel %vm256, %v255, 0.0
          %261 = vadd.xlane.f32.xlu0 %v260
          %v262 = vpop.xlane.xlu0 %261
          %v263 = vmax.f32 %v259, 1e-24
          %v264 = vmax.f32 %v262, 1e-24
          %v265 = vrsqrt.pop %v263
          %v266 = vrsqrt.pop %v264
          %v267 = vstv %s240
          %v268 = vmul.f32 %v267, %v265
          %v269 = vmul.f32 %v267, %v266
          %v270 = vmul.f32 %v252, %v268
          %v271 = vmul.f32 %v253, %v269
          %272 = vst.msk [vmem:[#allocation2] sm:$0xff] %vm256, %v270
          %273 = vst.msk [vmem:[#allocation2 + $0x8] sm:$0xff] %vm256, %v271
        $region48: #{tpu_custom_call.1} parent=31 // pred_fallthru
          _
        %v274 = vld [vmem:[#allocation2] sm:$0xff]
        %v275 = vld [vmem:[#allocation2 + $0x8] sm:$0xff]
        // Predicated region
        $region49: #{tpu_custom_call.1} parent=31 // pred_check
          %p276 = pneg %p241
        $region50: #{tpu_custom_call.1} parent=31 // pred_check_branch
          %278 = sbr.rel (%p276) target = $region52
        $region51: #{tpu_custom_call.1} parent=31 // pred_region
          %v279 = vld [vmem:[%s213] sm:$0xff]
          %v280 = vld [vmem:[%s213 + $0x8] sm:$0xff]
          %v281 = vmul.f32 %v279, %v279
          %v282 = vmul.f32 %v280, %v280
          %vm283 = vcmask 523264
          %v284 = vsel %vm283, %v281, 0.0
          %285 = vadd.xlane.f32.xlu0 %v284
          %v286 = vpop.xlane.xlu0 %285
          %v287 = vsel %vm283, %v282, 0.0
          %288 = vadd.xlane.f32.xlu0 %v287
          %v289 = vpop.xlane.xlu0 %288
          %v290 = vmax.f32 %v286, 1e-24
          %v291 = vmax.f32 %v289, 1e-24
          %v292 = vrsqrt.pop %v290
          %v293 = vrsqrt.pop %v291
          %v294 = vmul.f32 %v279, %v292
          %v295 = vmul.f32 %v280, %v293
          %s296 = smul.u32 %s27, 16
          %s297 = scalar_lea.vmem [#allocation3], %s296
          %298 = vst.msk [vmem:[%s297] sm:$0xff] %vm283, %v294
          %299 = vst.msk [vmem:[%s297 + $0x8] sm:$0xff] %vm283, %v295
        $region52: #{tpu_custom_call.1} parent=31 // pred_fallthru
          _
        %s300 = smul.u32 %s27, 16
        %s301 = scalar_lea.vmem [#allocation3], %s300
        %v302 = vld [vmem:[%s301] sm:$0xff]
        %v303 = vld [vmem:[%s301 + $0x8] sm:$0xff]
        %vm304 = vcmask 523264
        %v306 = vsel %vm304, %v274, 0
        %v309 = vsel %vm304, %v275, 0
        %v312 = vsel %vm304, %v302, 0
        %v315 = vsel %vm304, %v303, 0
        %317 = vmatprep.subr.mxu0 0.0
        %318 = vmatpush1.xpose.msra.mxu0 %v312
        %319 = vmatprep.subr.mxu0 0.0
        %320 = vmatpush1.xpose.msra.mxu0 %v315
        %321 = vmatprep.subr.mxu0 0.0
        %322 = vmatpush1.xpose.msra.mxu0 0.0
        %323 = vmatprep.subr.mxu0 0.0
        %324 = vmatpush1.xpose.msra.mxu0 0.0
        %325 = vmatprep.subr.mxu0 0.0
        %326 = vmatpush1.xpose.msra.mxu0 0.0
        %327 = vmatprep.subr.mxu0 0.0
        %328 = vmatpush1.xpose.msra.mxu0 0.0
        %329 = vmatprep.subr.mxu0 0.0
        %330 = vmatpush1.xpose.msra.mxu0 0.0
        %331 = vmatprep.subr.mxu0 0.0
        %332 = vmatpush1.xpose.msra.mxu0 0.0
        %333 = vmatprep.subr.mxu0 0.0
        %334 = vmatpush1.xpose.msra.mxu0 0.0
        %335 = vmatprep.subr.mxu0 0.0
        %336 = vmatpush1.xpose.msra.mxu0 0.0
        %337 = vmatprep.subr.mxu0 0.0
        %338 = vmatpush1.xpose.msra.mxu0 0.0
        %339 = vmatprep.subr.mxu0 0.0
        %340 = vmatpush1.xpose.msra.mxu0 0.0
        %341 = vmatprep.subr.mxu0 0.0
        %342 = vmatpush1.xpose.msra.mxu0 0.0
        %343 = vmatprep.subr.mxu0 0.0
        %344 = vmatpush1.xpose.msra.mxu0 0.0
        %345 = vmatprep.subr.mxu0 0.0
        %346 = vmatpush1.xpose.msra.mxu0 0.0
        %347 = vmatprep.subr.mxu0 0.0
        %348 = vmatpush1.xpose.msra.mxu0 0.0
        %349 = vmatprep.subr.mxu0 0.0
        %350 = vmatpush1.xpose.msra.mxu0 0.0
        %351 = vmatprep.subr.mxu0 0.0
        %352 = vmatpush1.xpose.msra.mxu0 0.0
        %353 = vmatprep.subr.mxu0 0.0
        %354 = vmatpush1.xpose.msra.mxu0 0.0
        %355 = vmatprep.subr.mxu0 0.0
        %356 = vmatpush1.xpose.msra.mxu0 0.0
        %357 = vmatprep.subr.mxu0 0.0
        %358 = vmatpush1.xpose.msra.mxu0 0.0
        %359 = vmatprep.subr.mxu0 0.0
        %360 = vmatpush1.xpose.msra.mxu0 0.0
        %361 = vmatprep.subr.mxu0 0.0
        %362 = vmatpush1.xpose.msra.mxu0 0.0
        %363 = vmatprep.subr.mxu0 0.0
        %364 = vmatpush1.xpose.msra.mxu0 0.0
        %365 = vmatprep.subr.mxu0 0.0
        %366 = vmatpush1.xpose.msra.mxu0 0.0
        %367 = vmatprep.subr.mxu0 0.0
        %368 = vmatpush1.xpose.msra.mxu0 0.0
        %369 = vmatprep.subr.mxu0 0.0
        %370 = vmatpush1.xpose.msra.mxu0 0.0
        %371 = vmatprep.subr.mxu0 0.0
        %372 = vmatpush1.xpose.msra.mxu0 0.0
        %373 = vmatprep.subr.mxu0 0.0
        %374 = vmatpush1.xpose.msra.mxu0 0.0
        %375 = vmatprep.subr.mxu0 0.0
        %376 = vmatpush1.xpose.msra.mxu0 0.0
        %377 = vmatprep.subr.mxu0 0.0
        %378 = vmatpush1.xpose.msra.mxu0 0.0
        %379 = vmatprep.subr.mxu0 0.0
        %380 = vmatpush1.xpose.msra.mxu0 0.0
        %381 = vmatprep.mubr.f32.mxu0 0.0
        %382 = vmatmul.mubr.f32.gmra.mrb[0].mxu0 %v306
        %v383 = vpop.f32.mrb[0].mxu0
        %v384 = vadd.f32 0.0, %v383
        %v385 = vpop.f32.mrb[0].mxu0
        %386 = vmatprep.mubr.f32.mxu0 0.0
        %387 = vmatmul.mubr.f32.gmra.mrb[0].mxu0 %v309
        %v388 = vpop.f32.mrb[0].mxu0
        %v389 = vadd.f32 0.0, %v388
        %v390 = vpop.f32.mrb[0].mxu0
        %391 = vdwg.mxu0
        %v392 = vstv %s240
        %v393 = vsub.f32 %v384, %v392
        %v394 = vsub.f32 %v389, %v392
        %v395 = vmul.f32 %v393, 1.442695
        %v396 = vpow.pop %v395
        %v397 = vmul.f32 %v394, 1.442695
        %v398 = vpow.pop %v397
        %vm399 = vcmask 130048
        %v400 = vsel %vm399, %v396, 0.0
        %401 = vadd.xlane.f32.xlu0 %v400
        %v402 = vpop.xlane.xlu0 %401
        %v403 = vsel %vm399, %v398, 0.0
        %404 = vadd.xlane.f32.xlu0 %v403
        %v405 = vpop.xlane.xlu0 %404
        // Predicated region
        $region53: #{tpu_custom_call.1} parent=31 // pred_check
          %p406 = pneg %p242
        $region54: #{tpu_custom_call.1} parent=31 // pred_check_branch
          %408 = sbr.rel (%p406) target = $region56
        $region55: #{tpu_custom_call.1} parent=31 // pred_region
          %vm409 = vcmask 7168
          %410 = vst.msk [vmem:[#allocation4] sm:$0xff] %vm409, %v402
          %411 = vst.msk [vmem:[#allocation4 + $0x8] sm:$0xff] %vm409, %v405
        $region56: #{tpu_custom_call.1} parent=31 // pred_fallthru
          _
        %p412 = scmp.gt.s32.totalorder %s27, 0
        // Predicated region
        $region57: #{tpu_custom_call.1} parent=31 // pred_check
          %p413 = pneg %p412
        $region58: #{tpu_custom_call.1} parent=31 // pred_check_branch
          %415 = sbr.rel (%p413) target = $region60
        $region59: #{tpu_custom_call.1} parent=31 // pred_region
          %v416 = vld [vmem:[#allocation4] sm:$0xff]
          %v417 = vld [vmem:[#allocation4 + $0x8] sm:$0xff]
          %v418 = vadd.f32 %v416, %v402
          %v419 = vadd.f32 %v417, %v405
          %vm420 = vcmask 7168
          %421 = vst.msk [vmem:[#allocation4] sm:$0xff] %vm420, %v418
          %422 = vst.msk [vmem:[#allocation4 + $0x8] sm:$0xff] %vm420, %v419
        $region60: #{tpu_custom_call.1} parent=31 // pred_fallthru
          _
        %v423 = vadd.f32 %v400, %v403
        %v424 = vrot.slane %v423, 4
        %v425 = vadd.f32 %v423, %v424
        %v426 = vrot.slane %v425, 2
        %v427 = vadd.f32 %v425, %v426
        %v428 = vrot.slane %v427, 1
        %v429 = vadd.f32 %v427, %v428
        // Predicated region
        $region61: #{tpu_custom_call.1} parent=31 // pred_check
          %p430 = pneg %p241
        $region62: #{tpu_custom_call.1} parent=31 // pred_check_branch
          %432 = sbr.rel (%p430) target = $region64
        $region63: #{tpu_custom_call.1} parent=31 // pred_region
          %s433 = scalar_lea.vmem [#allocation5], %s27
          %vm434 = vcmask 122880
          %435 = vst.msk [vmem:[%s433] sm:$0x1] %vm434, %v429
        $region64: #{tpu_custom_call.1} parent=31 // pred_fallthru
          _
        %p436 = scmp.gt.s32.totalorder %s26, 0
        // Predicated region
        $region65: #{tpu_custom_call.1} parent=31 // pred_check
          %p437 = pneg %p436
        $region66: #{tpu_custom_call.1} parent=31 // pred_check_branch
          %439 = sbr.rel (%p437) target = $region68
        $region67: #{tpu_custom_call.1} parent=31 // pred_region
          %s440 = scalar_lea.vmem [#allocation5], %s27
          %v441 = vld [vmem:[%s440] sm:$0x1]
          %v442 = vadd.f32 %v441, %v429
          %vm443 = vcmask 122880
          %444 = vst.msk [vmem:[%s440] sm:$0x1] %vm443, %v442
        $region68: #{tpu_custom_call.1} parent=31 // pred_fallthru
          _
        %p445 = scmp.eq.s32.totalorder %s26, %s27
        // Predicated region
        $region69: #{tpu_custom_call.1} parent=31 // pred_check
          %p446 = pneg %p445
        $region70: #{tpu_custom_call.1} parent=31 // pred_check_branch
          %448 = sbr.rel (%p446) target = $region72
        $region71: #{tpu_custom_call.1} parent=31 // pred_region
          %v449 = vmul.f32 %v274, %v302
          %v450 = vmul.f32 %v275, %v303
          %v451 = vsel %vm304, %v449, 0.0
          %v452 = vsel %vm304, %v450, 0.0
          %v453 = vadd.f32 %v451, %v452
          %454 = vadd.xlane.f32.xlu0 %v453
          %v455 = vpop.xlane.xlu0 %454
          %v456 = vrot.slane %v455, 4
          %v457 = vadd.f32 %v455, %v456
          %v458 = vrot.slane %v457, 2
          %v459 = vadd.f32 %v457, %v458
          %v460 = vrot.slane %v459, 1
          %v461 = vadd.f32 %v459, %v460
          %s462 = vtos %v461
          %s463 = sld [smem:[#allocation6]]
          %s464 = smul.f32 %s462, 2.0
          %s465 = ssub.f32 %s463, %s464
          %s466 = scalar_lea.smem [#allocation6], 0
          %467 = sst [smem:[%s466]] %s465
        $region72: #{tpu_custom_call.1} parent=31 // pred_fallthru
          _
        %p468 = scmp.eq.s32.totalorder %s27, 1
        // Predicated region
        $region73: #{tpu_custom_call.1} parent=31 // pred_check
          %p469 = pneg %p468
        $region74: #{tpu_custom_call.1} parent=31 // pred_check_branch
          %471 = sbr.rel (%p469) target = $region76
        $region75: #{tpu_custom_call.1} parent=31 // pred_region
          %s472 = sld [smem:[#allocation6]]
          %v473 = vld [vmem:[#allocation4] sm:$0xff]
          %v474 = vld [vmem:[#allocation4 + $0x8] sm:$0xff]
          %v475 = vlog2.pop %v473
          %v476 = vmul.f32 %v475, 0.6931472
          %v477 = vlog2.pop %v474
          %v478 = vmul.f32 %v477, 0.6931472
          %v479 = vadd.f32 %v392, %v476
          %v480 = vadd.f32 %v392, %v478
          %vm481 = vcmask 7168
          %v482 = vsel %vm481, %v479, 0.0
          %v483 = vsel %vm481, %v480, 0.0
          %v484 = vadd.f32 %v482, %v483
          %485 = vadd.xlane.f32.xlu0 %v484
          %v486 = vpop.xlane.xlu0 %485
          %v487 = vrot.slane %v486, 4
          %v488 = vadd.f32 %v486, %v487
          %v489 = vrot.slane %v488, 2
          %v490 = vadd.f32 %v488, %v489
          %v491 = vrot.slane %v490, 1
          %v492 = vadd.f32 %v490, %v491
          %s493 = vtos %v492
          %s494 = sadd.f32 %s472, %s493
          %s495 = scalar_lea.smem [#allocation6], 0
          %496 = sst [smem:[%s495]] %s494
        $region76: #{tpu_custom_call.1} parent=31 // pred_fallthru
          _
        %p497 = scmp.eq.s32.totalorder %s26, 1
        // Predicated region
        $region77: #{tpu_custom_call.1} parent=31 // pred_check
          %p498 = pneg %p497
        $region78: #{tpu_custom_call.1} parent=31 // pred_check_branch
          %500 = sbr.rel (%p498) target = $region80
        $region79: #{tpu_custom_call.1} parent=31 // pred_region
          %s501 = sld [smem:[#allocation6]]
          %s502 = scalar_lea.vmem [#allocation5], %s27
          %v503 = vld [vmem:[%s502] sm:$0x1]
          %v504 = vlog2.pop %v503
          %v505 = vmul.f32 %v504, 0.6931472
          %v506 = vadd.f32 %v392, %v505
          %vm507 = vcmask 122880
          %v508 = vsel %vm507, %v506, 0.0
          %509 = vadd.xlane.f32.xlu0 %v508
          %v510 = vpop.xlane.xlu0 %509
          %v511 = vrot.slane %v510, 4
          %v512 = vadd.f32 %v510, %v511
          %v513 = vrot.slane %v512, 2
          %v514 = vadd.f32 %v512, %v513
          %v515 = vrot.slane %v514, 1
          %v516 = vadd.f32 %v514, %v515
          %s517 = vtos %v516
          %s518 = sadd.f32 %s501, %s517
          %s519 = scalar_lea.smem [#allocation6], 0
          %520 = sst [smem:[%s519]] %s518
        $region80: #{tpu_custom_call.1} parent=31 // pred_fallthru
          _
        %p521 = pnand %p497, %p468
        %p522 = pneg %p521
        // Predicated region
        $region81: #{tpu_custom_call.1} parent=31 // pred_check
          _
        $region82: #{tpu_custom_call.1} parent=31 // pred_check_branch
          %524 = sbr.rel (%p521) target = $region84
        $region83: #{tpu_custom_call.1} parent=31 // pred_region
          %s525 = sld [smem:[#allocation6]]
          %s526 = smul.f32 %s525, 0.015625
          %s527 = scalar_lea.smem [#allocation13], 0
          %528 = sst [smem:[%s527]] %s526
        $region84: #{tpu_custom_call.1} parent=31 // pred_fallthru
          _
        // Predicated region
        $region85: #{tpu_custom_call.1} parent=31 // pred_check
          %p529 = pneg %p124
        $region86: #{tpu_custom_call.1} parent=31 // pred_check_branch
          %531 = sbr.rel (%p529) target = $region88
        $region87: #{tpu_custom_call.1} parent=31 // pred_region
          %s533 = ssub.s32 16, 16
          %534 = vsyncadd [#allocation10], %s533
          %537 = dma.smem_to_hbm [#allocation13], 16, %s3, [#allocation10]
        $region88: #{tpu_custom_call.1} parent=31 // pred_fallthru
          _
        // Predicated region
        $region89: #{tpu_custom_call.1} parent=31 // pred_check
          %p538 = pneg %p124
        $region90: #{tpu_custom_call.1} parent=31 // pred_check_branch
          %540 = sbr.rel (%p538) target = $region92
        $region91: #{tpu_custom_call.1} parent=31 // pred_region
          %541 = dma.done [#allocation10], 16
        $region92: #{tpu_custom_call.1} parent=31 // pred_fallthru
          _
        %542 = sfence
      $region32: #{tpu_custom_call.1} parent=5 // pred_fallthru
        _
      %p543 = scmp.le.s32.totalorder 2, %s17
      // Predicated region
      $region93: #{tpu_custom_call.1} parent=5 // pred_check
        %p544 = pneg %p543
      $region94: #{tpu_custom_call.1} parent=5 // pred_check_branch
        %546 = sbr.rel (%p544) target = $region96
      $region95: #{tpu_custom_call.1} parent=5 // pred_region
        %s547 = ssub.s32 %s17, 2
      $region96: #{tpu_custom_call.1} parent=5 // pred_fallthru
        _
    $region6: #{tpu_custom_call.1} parent=1 // loop_footer
      %s21 = sadd.s32 1, %s17
    $region7: #{tpu_custom_call.1} parent=1 // loop_footer_branch
      %16 = sbr.rel target = $region3
    $region8: #{tpu_custom_call.1} parent=1 // loop_exit
      _
    %548 = vsyncpa [#allocation9], 1
    %s549 = scalar_lea.sflag [#allocation9], 1
    %550 = vsyncpa %s549, 1
    %551 = vsyncpa [#allocation12], 1
    %s552 = scalar_lea.sflag [#allocation12], 1
    %553 = vsyncpa %s552, 1
    %554 = vsyncpa [#allocation10], 1
    %s555 = scalar_lea.sflag [#allocation10], 1
    %556 = vsyncpa %s555, 1

</llo_original>
